<compile_context>
chip_gen: v5e
topology: v5e:2x2
jax: 0.10.0
libtpu: 0.0.40
codegen_flags: <defaults>
</compile_context>

<pallas_src>
import functools

import jax
import jax.numpy as jnp
import numpy as np
from jax.experimental import pallas as pl
from jax.experimental.pallas import tpu as pltpu

_W_BYTES = 2      # bf16 weight / activations fed to the MXU
_ACC_BYTES = 4    # f32 accumulator / epilogue temporaries
_ROW_ALIGN = 16   # bf16 sublane packing -> keep row tiles multiples of 16


def _round_up(x, m):
    return ((x + m - 1) // m) * m


def _cdiv(a, b):
    return (a + b - 1) // b


def _vmem_capacity_bytes():
    try:
        info = pltpu.get_tpu_info()
        cap = getattr(info, "vmem_capacity_bytes", None)
        if cap:
            return int(cap)
    except Exception:
        pass
    return 64 * 1024 * 1024  # conservative fallback (v7x per-TC VMEM)


def _default_vmem_budget():
    # ~25% headroom for compiler-internal scratch / pipeline bookkeeping:
    # ~48 MiB on v7x (64 MiB VMEM), ~96 MiB on v5e/v6e (128 MiB VMEM).
    return (_vmem_capacity_bytes() * 3) // 4


# --------------------------------------------------------------------------- #
# Kernels
# --------------------------------------------------------------------------- #
def _fc_l2_kernel(x_ref, w_ref, b_ref, o_ref, *, no_imgnorm, use_abs):
    """Single-pass: full (padded) weight resident in VMEM."""
    # bf16 @ bf16 on the MXU, f32 accumulation.
    feats = jnp.dot(x_ref[...], w_ref[...], preferred_element_type=jnp.float32)
    feats = feats + b_ref[...]                         # (TM, E) + (1, E), f32
    if not no_imgnorm:
        # l2norm over the embed dim. rsqrt-multiply rides on the EUP.
        # Eps-free, matching the PyTorch l2norm (zero rows -> NaN, as in torch).
        sq = jnp.sum(feats * feats, axis=1, keepdims=True)
        feats = feats * jax.lax.rsqrt(sq)
    if use_abs:
        feats = jnp.abs(feats)
    o_ref[...] = feats.astype(o_ref.dtype)


def _fc_l2_ktiled_kernel(x_ref, w_ref, b_ref, o_ref, acc_ref, *,
                         no_imgnorm, use_abs):
    """K-tiled fallback: weight streamed in (tk, E) blocks, f32 accumulator."""
    k = pl.program_id(1)

    @pl.when(k == 0)
    def _():
        acc_ref[...] = jnp.zeros_like(acc_ref)

    acc_ref[...] += jnp.dot(x_ref[...], w_ref[...],
                            preferred_element_type=jnp.float32)

    @pl.when(k == pl.num_programs(1) - 1)
    def _():
        feats = acc_ref[...] + b_ref[...]
        if not no_imgnorm:
            sq = jnp.sum(feats * feats, axis=1, keepdims=True)
            feats = feats * jax.lax.rsqrt(sq)
        if use_abs:
            feats = jnp.abs(feats)
        o_ref[...] = feats.astype(o_ref.dtype)


# --------------------------------------------------------------------------- #
# Tiling plan
# --------------------------------------------------------------------------- #
def _plan_tiles(batch, k_pad, e_pad, out_bytes, budget):
    """Return (tm, b_pad_rows, tk, k_total, ktiled) under the VMEM budget."""
    # Pallas allocates 2 buffers per input even with a constant index_map.
    resident_w = 2 * k_pad * e_pad * _W_BYTES + 2 * e_pad * _ACC_BYTES
    ktiled = resident_w > budget // 2

    if not ktiled:
        per_row = (2 * k_pad * _W_BYTES        # streamed x tile (double-buffered)
                   + 2 * e_pad * out_bytes     # streamed out tile
                   + 2 * e_pad * _ACC_BYTES)   # f32 feats / feats^2 temporaries
        avail = max(budget - resident_w, _ROW_ALIGN * per_row)
        tm_max = max(_ROW_ALIGN,
                     min(512, (avail // per_row) // _ROW_ALIGN * _ROW_ALIGN))
        tk, k_total = k_pad, k_pad
    else:
        # Keep the double-buffered weight block under ~half the budget.
        tk_max = max(128, (budget // (4 * e_pad * _W_BYTES)) // 128 * 128)
        nk = _cdiv(k_pad, tk_max)
        tk = _round_up(_cdiv(k_pad, nk), 128)
        k_total = nk * tk
        resident = 2 * tk * e_pad * _W_BYTES + 2 * e_pad * _ACC_BYTES
        per_row = (2 * tk * _W_BYTES           # streamed x tile
                   + 2 * e_pad * out_bytes     # streamed out tile
                   + e_pad * _ACC_BYTES        # f32 accumulator scratch
                   + 2 * e_pad * _ACC_BYTES)   # f32 epilogue temporaries
        avail = max(budget - resident, _ROW_ALIGN * per_row)
        tm_max = max(_ROW_ALIGN,
                     min(512, (avail // per_row) // _ROW_ALIGN * _ROW_ALIGN))

    # Balance row tiles so ragged batches don't pad up to ~2x work; keep >=2
    # tiles on large batches so both v7x TensorCores get a share of the grid.
    min_tiles = 2 if batch >= 512 else 1
    ntiles = max(min_tiles, _cdiv(batch, tm_max))
    tm = _round_up(_cdiv(batch, ntiles), _ROW_ALIGN)
    b_pad_rows = ntiles * tm
    return tm, b_pad_rows, tk, k_total, ktiled


# --------------------------------------------------------------------------- #
# Parameters
# --------------------------------------------------------------------------- #
def init_encoder_text_params(key, text_dim, embed_size):
    """Xavier-uniform init matching the PyTorch init_weights()."""
    r = np.sqrt(6.0) / np.sqrt(text_dim + embed_size)
    # PyTorch weight is [embed_size, text_dim]; store the transpose for x @ W^T.
    w = jax.random.uniform(key, (embed_size, text_dim),
                           minval=-r, maxval=r, dtype=jnp.float32)
    w_t = jnp.transpose(w)                      # [text_dim, embed_size]
    b = jnp.zeros((embed_size,), jnp.float32)
    return w_t, b


def prepare_encoder_text_params(weight_t, bias):
    """Pad to lane-dense tiles and cast the weight to bf16 ONCE (not per call)."""
    K, E = weight_t.shape
    k_pad = _round_up(K, 128)
    # Prefer 256-aligned embed tiles (v6e/v7x MXU is 2x256^2) when E is large.
    e_pad = _round_up(E, 256) if E > 128 else _round_up(E, 128)
    w = jnp.pad(weight_t, ((0, k_pad - K), (0, e_pad - E))).astype(jnp.bfloat16)
    b = jnp.pad(bias.reshape(1, E).astype(jnp.float32),
                ((0, 0), (0, e_pad - E)))
    return w, b


# --------------------------------------------------------------------------- #
# Forward
# --------------------------------------------------------------------------- #
def encoder_text_forward(captions, w_pad, bias_pad, embed_size, *,
                         no_imgnorm=False, use_abs=False,
                         vmem_budget_bytes=None):
    """captions: [B, text_dim] f32; w_pad: [k_pad, e_pad] bf16 (prepared);
    bias_pad: [1, e_pad] f32 (prepared); returns [B, embed_size] in captions.dtype."""
    B, text_dim = captions.shape
    k_pad, e_pad = w_pad.shape
    assert text_dim <= k_pad and embed_size <= e_pad

    budget = int(vmem_budget_bytes) if vmem_budget_bytes else _default_vmem_budget()
    out_dtype = captions.dtype
    out_bytes = jnp.dtype(out_dtype).itemsize

    tm, b_pad_rows, tk, k_total, ktiled = _plan_tiles(
        B, k_pad, e_pad, out_bytes, budget)

    # Zero padding is exact for the matmul and the per-row l2 norm; padded rows
    # are sliced off at the end.
    x = captions
    if (b_pad_rows, k_total) != (B, text_dim):
        x = jnp.pad(x, ((0, b_pad_rows - B), (0, k_total - text_dim)))
    x = x.astype(jnp.bfloat16)
    w = w_pad
    if k_total != k_pad:  # only when K-tiling needs extra reduction padding
        w = jnp.pad(w, ((0, k_total - k_pad), (0, 0)))

    vmem_limit = min(max(budget, 32 * 1024 * 1024),
                     (_vmem_capacity_bytes() * 7) // 8)

    if not ktiled:
        kernel = functools.partial(_fc_l2_kernel,
                                   no_imgnorm=no_imgnorm, use_abs=use_abs)
        out = pl.pallas_call(
            kernel,
            out_shape=jax.ShapeDtypeStruct((b_pad_rows, e_pad), out_dtype),
            grid_spec=pl.GridSpec(
                grid=(b_pad_rows // tm,),
                in_specs=[
                    pl.BlockSpec((tm, k_total), lambda i: (i, 0)),     # streamed x
                    pl.BlockSpec((k_total, e_pad), lambda i: (0, 0)),  # resident W
                    pl.BlockSpec((1, e_pad), lambda i: (0, 0)),        # resident b
                ],
                out_specs=pl.BlockSpec((tm, e_pad), lambda i: (i, 0)),
            ),
            compiler_params=pltpu.CompilerParams(
                dimension_semantics=("parallel",),
                vmem_limit_bytes=vmem_limit,
            ),
        )(x, w, bias_pad)
    else:
        kernel = functools.partial(_fc_l2_ktiled_kernel,
                                   no_imgnorm=no_imgnorm, use_abs=use_abs)
        out = pl.pallas_call(
            kernel,
            out_shape=jax.ShapeDtypeStruct((b_pad_rows, e_pad), out_dtype),
            grid_spec=pltpu.PrefetchScalarGridSpec(
                num_scalar_prefetch=0,
                grid=(b_pad_rows // tm, k_total // tk),
                in_specs=[
                    pl.BlockSpec((tm, tk), lambda i, k: (i, k)),       # x block
                    pl.BlockSpec((tk, e_pad), lambda i, k: (k, 0)),    # W block
                    pl.BlockSpec((1, e_pad), lambda i, k: (0, 0)),     # resident b
                ],
                out_specs=pl.BlockSpec((tm, e_pad), lambda i, k: (i, 0)),
                scratch_shapes=[pltpu.VMEM((tm, e_pad), jnp.float32)],
            ),
            compiler_params=pltpu.CompilerParams(
                dimension_semantics=("parallel", "arbitrary"),
                vmem_limit_bytes=vmem_limit,
            ),
        )(x, w, bias_pad)

    return out[:B, :embed_size]


# --------------------------------------------------------------------------- #
# Self-test
# --------------------------------------------------------------------------- #
def _reference(captions, w_t, bias, *, no_imgnorm=False, use_abs=False):
    feats = captions @ w_t + bias[None, :]
    if not no_imgnorm:
        norm = jnp.sqrt(jnp.sum(feats ** 2, axis=1, keepdims=True))
        feats = feats / norm
    if use_abs:
        feats = jnp.abs(feats)
    return feats


if __name__ == "__main__":
    key = jax.random.PRNGKey(0)
    k_x, k_w, k_x2, k_w2 = jax.random.split(key, 4)

    # --- config 1: small shapes, single-pass (resident-weight) path ---------
    batch, text_dim, embed_size = 8, 32, 32
    captions = jax.random.normal(k_x, (batch, text_dim), dtype=jnp.float32)
    w_t, bias = init_encoder_text_params(k_w, text_dim, embed_size)
    w_pad, bias_pad = prepare_encoder_text_params(w_t, bias)

    ref = _reference(captions, w_t, bias)
    out = jax.block_until_ready(
        encoder_text_forward(captions, w_pad, bias_pad, embed_size))
    # bf16 MXU inputs with f32 accumulation -> loosened tolerances.
    np.testing.assert_allclose(np.asarray(out), np.asarray(ref),
                               rtol=3e-2, atol=3e-2)

    out_abs = jax.block_until_ready(
        encoder_text_forward(captions, w_pad, bias_pad, embed_size,
                             use_abs=True))
    np.testing.assert_allclose(np.asarray(out_abs),
                               np.abs(np.asarray(ref)), rtol=3e-2, atol=3e-2)

    # --- config 2: force the K-tiled accumulator path with a tiny budget ----
    batch2, text_dim2, embed_size2 = 16, 384, 64
    captions2 = jax.random.normal(k_x2, (batch2, text_dim2), dtype=jnp.float32)
    w_t2, bias2 = init_encoder_text_params(k_w2, text_dim2, embed_size2)
    w_pad2, bias_pad2 = prepare_encoder_text_params(w_t2, bias2)

    ref2 = _reference(captions2, w_t2, bias2)
    out2 = jax.block_until_ready(
        encoder_text_forward(captions2, w_pad2, bias_pad2, embed_size2,
                             vmem_budget_bytes=128 * 1024))
    np.testing.assert_allclose(np.asarray(out2), np.asarray(ref2),
                               rtol=3e-2, atol=3e-2)

    print("KERNEL_OK")
</pallas_src>

<mosaic_0001>
module attributes {stable_mosaic.version = 11 : i64} {
  func.func @_fc_l2_kernel(%arg0: i32, %arg1: memref<16x128xbf16, #tpu.memory_space<vmem>>, %arg2: memref<128x128xbf16, #tpu.memory_space<vmem>>, %arg3: memref<1x128xf32, #tpu.memory_space<vmem>>, %arg4: memref<16x128xf32, #tpu.memory_space<vmem>>) attributes {dimension_semantics = [#tpu.dimension_semantics<parallel>], iteration_bounds = array<i64: 1>, scalar_prefetch = 0 : i64, scratch_operands = 0 : i64, tpu.core_type = #tpu.core_type<tc>, window_params = [{transform_indices = @transform_0, window_bounds = array<i64: 16, 128>}, {pipeline_mode = #tpu.pipeline_mode<synchronous>, transform_indices = @transform_1, window_bounds = array<i64: 128, 128>}, {pipeline_mode = #tpu.pipeline_mode<synchronous>, transform_indices = @transform_2, window_bounds = array<i64: 1, 128>}, {transform_indices = @transform_3, window_bounds = array<i64: 16, 128>}]} {
    %c0 = arith.constant 0 : index
    %c0_0 = arith.constant 0 : index
    %0 = vector.load %arg1[%c0, %c0_0] : memref<16x128xbf16, #tpu.memory_space<vmem>>, vector<16x128xbf16>
    %c0_1 = arith.constant 0 : index
    %c0_2 = arith.constant 0 : index
    %1 = vector.load %arg2[%c0_1, %c0_2] : memref<128x128xbf16, #tpu.memory_space<vmem>>, vector<128x128xbf16>
    %cst = arith.constant dense<0.000000e+00> : vector<16x128xf32>
    %2 = tpu.matmul %0, %1, %cst {dimension_numbers = #tpu.dot_dimension_numbers<[1], [0], [0], [1], [0, 0, 1, 1], [], []>} : vector<16x128xbf16>, vector<128x128xbf16>, vector<16x128xf32> -> vector<16x128xf32>
    %c0_3 = arith.constant 0 : index
    %c0_4 = arith.constant 0 : index
    %3 = vector.load %arg3[%c0_3, %c0_4] : memref<1x128xf32, #tpu.memory_space<vmem>>, vector<1x128xf32>
    %4 = vector.broadcast %3 : vector<1x128xf32> to vector<16x128xf32>
    %5 = arith.addf %2, %4 : vector<16x128xf32>
    %6 = arith.mulf %5, %5 : vector<16x128xf32>
    %cst_5 = arith.constant dense<0.000000e+00> : vector<16xf32>
    %7 = vector.multi_reduction <add>, %6, %cst_5 [1] : vector<16x128xf32> to vector<16xf32>
    %8 = vector.shape_cast %7 : vector<16xf32> to vector<16x1xf32>
    %9 = math.rsqrt %8 : vector<16x1xf32>
    %10 = vector.broadcast %9 : vector<16x1xf32> to vector<16x128xf32>
    %11 = arith.mulf %5, %10 : vector<16x128xf32>
    %c0_6 = arith.constant 0 : index
    %c0_7 = arith.constant 0 : index
    %12 = vector.load %arg4[%c0_6, %c0_7] : memref<16x128xf32, #tpu.memory_space<vmem>>, vector<16x128xf32>
    tpu.vector_store %arg4[%c0_6, %c0_7], %11 {strides = array<i32>} : memref<16x128xf32, #tpu.memory_space<vmem>>, vector<16x128xf32>,
    return
  }
  func.func @transform_0(%arg0: i32) -> (i32, i32) {
    %c0_i32 = arith.constant 0 : i32
    %c0_i32_0 = arith.constant 0 : i32
    return %arg0, %c0_i32 : i32, i32
  }
  func.func @transform_1(%arg0: i32) -> (i32, i32) {
    %c0_i32 = arith.constant 0 : i32
    %c0_i32_0 = arith.constant 0 : i32
    %c0_i32_1 = arith.constant 0 : i32
    return %c0_i32, %c0_i32_0 : i32, i32
  }
  func.func @transform_2(%arg0: i32) -> (i32, i32) {
    %c0_i32 = arith.constant 0 : i32
    %c0_i32_0 = arith.constant 0 : i32
    %c0_i32_1 = arith.constant 0 : i32
    return %c0_i32, %c0_i32_0 : i32, i32
  }
  func.func @transform_3(%arg0: i32) -> (i32, i32) {
    %c0_i32 = arith.constant 0 : i32
    %c0_i32_0 = arith.constant 0 : i32
    return %arg0, %c0_i32 : i32, i32
  }
}

</mosaic_0001>

<llo_original>
// kernel: tpu_custom_call.1
$region0: #{tpu_custom_call.1}
  #allocation0 [shape = 'u32[]', space=smem, size = 0x4, offset = 0x4, fixed_abs, tag = 'smem constant byte address 0x4 - core index']
  #allocation1 [shape = 'u32[72,128]{1,0:T(1,128)}', space=vmem, size = 0x9000, scoped, tag = 'internal scratch']
  %s0 = inlined_call_operand.hbm [shape: bf16[16,128], index: 0, kind: input, shape index: {}]
  %s1 = inlined_call_operand.hbm [shape: bf16[128,128], index: 1, kind: input, shape index: {}]
  %s2 = inlined_call_operand.vmem [shape: f32[1,128], index: 2, kind: input, shape index: {}]
  %s3 = inlined_call_operand.hbm [shape: f32[16,128], index: 3, kind: output, shape index: {}]
  %s4 = sld [smem:[#allocation0]]
  $region30: #{tpu_custom_call.1} parent=0
    _
  %s6 = ssub.s32 1, %s4
  %s7 = scalar_select 0, %s6, %s4
  $region1: #{tpu_custom_call.1} parent=0
    #allocation2 [shape = 'u8[4096]{0}', space=vmem, size = 0x1000, scoped, tag = 'input window, operand 0, single buffered']
    #allocation3 [shape = 's32[1]{0}', space=sflag, size = 0x4, scoped, tag = 'scoped memory for tpu_custom_call.1']
    #allocation4 [shape = 's32[1]{0}', space=sflag, size = 0x4, scoped, tag = 'scoped memory for tpu_custom_call.1']
    #allocation5 [shape = 'u8[32768]{0}', space=vmem, size = 0x8000, scoped, tag = 'input window, operand 1, single buffered']
    #allocation6 [shape = 's32[1]{0}', space=sflag, size = 0x4, scoped, tag = 'scoped memory for tpu_custom_call.1']
    #allocation7 [shape = 'u8[8192]{0}', space=vmem, size = 0x2000, scoped, tag = 'output window, operand 0, single buffered']
    %8 = vsyncpa [#allocation3], 0
    %9 = vsyncpa [#allocation6], 0
    %10 = vsyncpa [#allocation4], 0
    // Predicated region
    $region2: #{tpu_custom_call.1} parent=1 // pred_check
      _
    $region3: #{tpu_custom_call.1} parent=1 // pred_check_branch
      %12 = sbr.rel (0) target = $region5
    $region4: #{tpu_custom_call.1} parent=1 // pred_region
      %14 = vsyncadd [#allocation3], 0
      %s15 = sshll.u32 %s0, 4
      %s16 = int_to_ptr.hbm [resolvable:$true] %s15
      %s17 = sshll.u32 [#allocation2], 4
      %s18 = int_to_ptr.vmem [resolvable:$true] %s17
      %23 = dma.hbm_to_vmem [thread:$0]  %s16, 128, %s18, [#allocation3], 64, 64, 4
    $region5: #{tpu_custom_call.1} parent=1 // pred_fallthru
      _
    // Predicated region
    $region6: #{tpu_custom_call.1} parent=1 // pred_check
      _
    $region7: #{tpu_custom_call.1} parent=1 // pred_check_branch
      %25 = sbr.rel (0) target = $region9
    $region8: #{tpu_custom_call.1} parent=1 // pred_region
      %27 = vsyncadd [#allocation6], 0
      %s28 = sshll.u32 %s1, 4
      %s29 = int_to_ptr.hbm [resolvable:$true] %s28
      %s30 = sshll.u32 [#allocation5], 4
      %s31 = int_to_ptr.vmem [resolvable:$true] %s30
      %36 = dma.hbm_to_vmem [thread:$0]  %s29, 1024, %s31, [#allocation6], 64, 64, 4
    $region9: #{tpu_custom_call.1} parent=1 // pred_fallthru
      _
    // Predicated region
    $region10: #{tpu_custom_call.1} parent=1 // pred_check
      _
    $region11: #{tpu_custom_call.1} parent=1 // pred_check_branch
      %38 = sbr.rel (0) target = $region13
    $region12: #{tpu_custom_call.1} parent=1 // pred_region
      _
    $region13: #{tpu_custom_call.1} parent=1 // pred_fallthru
      _
    // Predicated region
    $region14: #{tpu_custom_call.1} parent=1 // pred_check
      _
    $region15: #{tpu_custom_call.1} parent=1 // pred_check_branch
      %40 = sbr.rel (0) target = $region17
    $region16: #{tpu_custom_call.1} parent=1 // pred_region
      %42 = dma.done [#allocation3], 128
    $region17: #{tpu_custom_call.1} parent=1 // pred_fallthru
      _
    // Predicated region
    $region18: #{tpu_custom_call.1} parent=1 // pred_check
      _
    $region19: #{tpu_custom_call.1} parent=1 // pred_check_branch
      %44 = sbr.rel (0) target = $region21
    $region20: #{tpu_custom_call.1} parent=1 // pred_region
      %46 = dma.done [#allocation6], 1024
    $region21: #{tpu_custom_call.1} parent=1 // pred_fallthru
      _
    %v47 = vld [vmem:[#allocation2] sm:$0xf]
    %v48 = vld [vmem:[#allocation2 + $0x4] sm:$0xf]
    %v49 = vld [vmem:[#allocation5] sm:$0xf]
    %v50 = vld [vmem:[#allocation5 + $0x4] sm:$0xf]
    %v51 = vld [vmem:[#allocation5 + $0x8] sm:$0xf]
    %v52 = vld [vmem:[#allocation5 + $0xc] sm:$0xf]
    %v53 = vld [vmem:[#allocation5 + $0x10] sm:$0xf]
    %v54 = vld [vmem:[#allocation5 + $0x14] sm:$0xf]
    %v55 = vld [vmem:[#allocation5 + $0x18] sm:$0xf]
    %v56 = vld [vmem:[#allocation5 + $0x1c] sm:$0xf]
    %v57 = vld [vmem:[#allocation5 + $0x20] sm:$0xf]
    %v58 = vld [vmem:[#allocation5 + $0x24] sm:$0xf]
    %v59 = vld [vmem:[#allocation5 + $0x28] sm:$0xf]
    %v60 = vld [vmem:[#allocation5 + $0x2c] sm:$0xf]
    %v61 = vld [vmem:[#allocation5 + $0x30] sm:$0xf]
    %v62 = vld [vmem:[#allocation5 + $0x34] sm:$0xf]
    %v63 = vld [vmem:[#allocation5 + $0x38] sm:$0xf]
    %v64 = vld [vmem:[#allocation5 + $0x3c] sm:$0xf]
    %v65 = vld [vmem:[%s2] sm:$0x1]
    %v67 = vperm.slane %v65, 0
    %v71 = vunpack.c.l.b16 %v47
    %v72 = vunpack.c.l.b16 %v48
    %v73 = vpack.c.b16 %v72, %v71
    %v91 = vunpack.c.l.b16 %v49
    %v92 = vunpack.c.l.b16 %v50
    %v93 = vunpack.c.l.b16 %v51
    %v94 = vunpack.c.l.b16 %v52
    %v95 = vunpack.c.l.b16 %v53
    %v96 = vunpack.c.l.b16 %v54
    %v97 = vunpack.c.l.b16 %v55
    %v98 = vunpack.c.l.b16 %v56
    %v99 = vunpack.c.l.b16 %v57
    %v100 = vunpack.c.l.b16 %v58
    %v101 = vunpack.c.l.b16 %v59
    %v102 = vunpack.c.l.b16 %v60
    %v103 = vunpack.c.l.b16 %v61
    %v104 = vunpack.c.l.b16 %v62
    %v105 = vunpack.c.l.b16 %v63
    %v106 = vunpack.c.l.b16 %v64
    %v107 = vpack.c.b16 %v92, %v91
    %v108 = vpack.c.b16 %v94, %v93
    %v109 = vpack.c.b16 %v96, %v95
    %v110 = vpack.c.b16 %v98, %v97
    %v111 = vpack.c.b16 %v100, %v99
    %v112 = vpack.c.b16 %v102, %v101
    %v113 = vpack.c.b16 %v104, %v103
    %v114 = vpack.c.b16 %v106, %v105
    %123 = vmatpush.bf16.msra.mxu0 %v114
    %124 = vmatpush.bf16.msra.mxu0 %v113
    %125 = vmatpush.bf16.msra.mxu0 %v112
    %126 = vmatpush.bf16.msra.mxu0 %v111
    %127 = vmatpush.bf16.msra.mxu0 %v110
    %128 = vmatpush.bf16.msra.mxu0 %v109
    %129 = vmatpush.bf16.msra.mxu0 %v108
    %130 = vmatpush.bf16.msra.mxu0 %v107
    %131 = vmatmul.bf16.gmra.mxu0 %v73
    %v132 = vpop.f32.mrf.mxu0
    %v133 = vadd.f32 %v67, %v132
    %v134 = vpop.f32.mrf.mxu0
    %v135 = vadd.f32 %v67, %v134
    %136 = vdwg.mxu0
    %v137 = vmul.f32 %v133, %v133
    %v138 = vmul.f32 %v135, %v135
    %139 = vadd.xlane.f32.xlu0 %v137
    %v140 = vpop.xlane.xlu0 %139
    %141 = vadd.xlane.f32.xlu0 %v138
    %v142 = vpop.xlane.xlu0 %141
    %v143 = vrsqrt.pop %v140
    %v144 = vmul.f32 %v143, %v140
    %v145 = vmul.f32 %v144, %v143
    %v146 = vmul.f32 0.5, %v145
    %v147 = vsub.f32 1.5, %v146
    %v148 = vmul.f32 %v143, %v147
    %vm149 = vweird.f32 %v140
    %vm150 = vweird.f32 %v143
    %vm151 = vmor %vm149, %vm150
    %v152 = vsel %vm151, %v143, %v148
    %v153 = vrsqrt.pop %v142
    %v154 = vmul.f32 %v153, %v142
    %v155 = vmul.f32 %v154, %v153
    %v156 = vmul.f32 0.5, %v155
    %v157 = vsub.f32 1.5, %v156
    %v158 = vmul.f32 %v153, %v157
    %vm159 = vweird.f32 %v142
    %vm160 = vweird.f32 %v153
    %vm161 = vmor %vm159, %vm160
    %v162 = vsel %vm161, %v153, %v158
    %v163 = vmul.f32 %v133, %v152
    %v164 = vmul.f32 %v135, %v162
    %165 = vst [vmem:[#allocation7] sm:$0xff] %v163
    %166 = vst [vmem:[#allocation7 + $0x8] sm:$0xff] %v164
    // Predicated region
    $region22: #{tpu_custom_call.1} parent=1 // pred_check
      _
    $region23: #{tpu_custom_call.1} parent=1 // pred_check_branch
      %168 = sbr.rel (0) target = $region25
    $region24: #{tpu_custom_call.1} parent=1 // pred_region
      %170 = vsyncadd [#allocation4], 0
      %s171 = sshll.u32 [#allocation7], 4
      %s172 = int_to_ptr.vmem [resolvable:$true] %s171
      %s173 = sshll.u32 %s3, 4
      %s174 = int_to_ptr.hbm [resolvable:$true] %s173
      %179 = dma.vmem_to_hbm [thread:$0]  %s172, 256, %s174, [#allocation4], 128, 128, 8
    $region25: #{tpu_custom_call.1} parent=1 // pred_fallthru
      _
    // Predicated region
    $region26: #{tpu_custom_call.1} parent=1 // pred_check
      _
    $region27: #{tpu_custom_call.1} parent=1 // pred_check_branch
      %181 = sbr.rel (0) target = $region29
    $region28: #{tpu_custom_call.1} parent=1 // pred_region
      %183 = dma.done [#allocation4], 256
    $region29: #{tpu_custom_call.1} parent=1 // pred_fallthru
      _
    %184 = vsyncpa [#allocation3], 1
    %185 = vsyncpa [#allocation6], 1
    %186 = vsyncpa [#allocation4], 1

</llo_original>
